<compile_context>
chip_gen: v5e
topology: v5e:2x2
jax: 0.10.0
libtpu: 0.0.40
codegen_flags: <defaults>
</compile_context>

<pallas_src>
import jax
import jax.numpy as jnp
from jax.experimental import pallas as pl
from jax.experimental.pallas import tpu as pltpu


FEAT = 1000          # backbone output features (ImageNet logits)
HIDDEN = 100         # nn.Linear(1000, 100)
HIDDEN_PAD = 128
OUT = 2              # nn.Linear(100, 2)
OUT_PAD = 128


def _head_kernel(x_ref, w01_ref, b01_ref, w2_ref, b2_ref, o_ref, acc_ref):
    # x_ref:   (tb, tk)           f32   -- flattened image tile (cast to bf16 here)
    # w01_ref: (tk, 128)          bf16  -- folded backbone@Linear1 K-slice
    # b01_ref: (1, 128)           f32
    # w2_ref:  (128, 128)         bf16  -- Linear2, zero-padded (100,2)->(128,128)
    # b2_ref:  (1, 128)           f32
    # o_ref:   (tb, 128)          f32   -- only [:, :2] meaningful
    # acc_ref: (tb, 128)          f32   -- hidden-layer accumulator across K tiles
    k = pl.program_id(1)

    @pl.when(k == 0)
    def _init():
        acc_ref[...] = jnp.zeros_like(acc_ref)

    # In-kernel f32->bf16 cast (VPU); MXU accumulates in f32.
    acc_ref[...] += jnp.dot(x_ref[...].astype(jnp.bfloat16), w01_ref[...],
                            preferred_element_type=jnp.float32)

    @pl.when(k == pl.num_programs(1) - 1)
    def _finalize():
        h = jnp.maximum(acc_ref[...] + b01_ref[...], 0.0)            # bias + ReLU
        o = jnp.dot(h.astype(w2_ref.dtype), w2_ref[...],
                    preferred_element_type=jnp.float32)
        o_ref[...] = o + b2_ref[...]


def _pick_batch_tile(B):
    """Single tile for small B; >=2 sublane-aligned tiles (v7x megacore) for
    larger B; capped at 1024 rows so the f32 x block fits default scoped VMEM
    on every generation (v5e 16 MiB, v7x 32 MiB)."""
    if B <= 256:
        return B
    return min(1024, max(8, ((B + 15) // 16) * 8))   # ~B/2 rounded to sublanes


def _pick_k_tile(F_pad):
    """Largest multiple-of-128 exact divisor of F_pad, capped at 1024, so the
    K grid never reads out of bounds along the contraction dim."""
    if F_pad <= 1024:
        return F_pad
    for cand in range(1024, 127, -128):
        if F_pad % cand == 0:
            return cand
    return 128


def model_ftt_forward(x_img, kernel_params):
    """x_img: (B, C, H, W) float32.  Returns (B, 2) float32."""
    w01, b01, w2p, b2p = kernel_params
    B = x_img.shape[0]
    F_pad = w01.shape[0]

    # Metadata-only flatten; x stays f32 in HBM (cast happens inside the kernel).
    x_flat = x_img.reshape(B, -1)
    F_in = x_flat.shape[1]
    if F_in != F_pad:
        # Only hit when the flattened feature count is not 128-aligned; costs
        # one extra HBM round trip of x, unavoidable without a ragged K tile.
        x_flat = jnp.pad(x_flat, ((0, 0), (0, F_pad - F_in)))

    tb = _pick_batch_tile(B)
    nb = pl.cdiv(B, tb)            # edge batch tile may be partial (writes discarded)
    tk = _pick_k_tile(F_pad)
    nk = F_pad // tk

    out = pl.pallas_call(
        _head_kernel,
        out_shape=jax.ShapeDtypeStruct((B, OUT_PAD), jnp.float32),
        grid=(nb, nk),
        in_specs=[
            pl.BlockSpec((tb, tk), lambda i, k: (i, k)),                # x: batch x K tiles
            pl.BlockSpec((tk, HIDDEN_PAD), lambda i, k: (k, 0)),        # W01: K tiles
            pl.BlockSpec((1, HIDDEN_PAD), lambda i, k: (0, 0)),         # b01: resident
            pl.BlockSpec((HIDDEN_PAD, OUT_PAD), lambda i, k: (0, 0)),   # W2: resident
            pl.BlockSpec((1, OUT_PAD), lambda i, k: (0, 0)),            # b2: resident
        ],
        out_specs=pl.BlockSpec((tb, OUT_PAD), lambda i, k: (i, 0)),
        scratch_shapes=[pltpu.VMEM((tb, HIDDEN_PAD), jnp.float32)],
        compiler_params=pltpu.CompilerParams(
            dimension_semantics=("parallel", "arbitrary")),
    )(x_flat, w01, b01, w2p, b2p)

    return out[:, :OUT]


def init_params(key, in_features):
    """f32 parameters matching the PyTorch module's structure (stub backbone + head)."""
    k0, k1, k2 = jax.random.split(key, 3)
    w0 = jax.random.normal(k0, (in_features, FEAT), jnp.float32) * 0.02   # backbone stub
    b0 = jnp.zeros((1, FEAT), jnp.float32)
    w1 = jax.random.normal(k1, (FEAT, HIDDEN), jnp.float32) * 0.02        # Linear(1000,100)
    b1 = jnp.full((1, HIDDEN), 0.01, jnp.float32)
    w2 = jax.random.normal(k2, (HIDDEN, OUT), jnp.float32) * 0.02         # Linear(100,2)
    b2 = jnp.full((1, OUT), 0.01, jnp.float32)
    return (w0, b0, w1, b1, w2, b2)


def fold_and_pack(params):
    """Fold the linear backbone stub into the first head layer, pad to
    lane/sublane-dense shapes (F -> multiple of 128, hidden/out -> 128),
    cast weights to bf16 for the HBM->VMEM stream."""
    w0, b0, w1, b1, w2, b2 = params
    w01 = w0 @ w1              # (F, 100), exact fold (no nonlinearity between them)
    b01 = b0 @ w1 + b1         # (1, 100)
    F = w01.shape[0]
    F_pad = ((F + 127) // 128) * 128
    w01p = jnp.zeros((F_pad, HIDDEN_PAD), jnp.float32).at[:F, :HIDDEN].set(w01)
    b01p = jnp.zeros((1, HIDDEN_PAD), jnp.float32).at[:, :HIDDEN].set(b01)
    w2p = jnp.zeros((HIDDEN_PAD, OUT_PAD), jnp.float32).at[:HIDDEN, :OUT].set(w2)
    b2p = jnp.zeros((1, OUT_PAD), jnp.float32).at[:, :OUT].set(b2)
    return (w01p.astype(jnp.bfloat16), b01p, w2p.astype(jnp.bfloat16), b2p)


def reference_folded(x_img, kernel_params):
    """Same math/precision as the kernel (folded, bf16 operands, f32 acc)."""
    w01, b01, w2p, b2p = kernel_params
    x = x_img.reshape(x_img.shape[0], -1).astype(jnp.bfloat16)
    F_in = x.shape[1]
    h = jnp.dot(x, w01[:F_in], preferred_element_type=jnp.float32) + b01
    h = jnp.maximum(h, 0.0)
    o = jnp.dot(h.astype(jnp.bfloat16), w2p, preferred_element_type=jnp.float32) + b2p
    return o[:, :OUT]


def reference_f32(x_img, params):
    """Original (unfolded) f32 three-matmul path."""
    w0, b0, w1, b1, w2, b2 = params
    x = x_img.reshape(x_img.shape[0], -1)
    feat = x @ w0 + b0
    h = jnp.maximum(feat @ w1 + b1, 0.0)
    return h @ w2 + b2


if __name__ == "__main__":
    key = jax.random.PRNGKey(0)
    k_x, k_p = jax.random.split(key)

    # small shapes: batch=2, channels=4, spatial=16 -> flattened features = 1024
    B, C, H, W = 2, 4, 16, 16
    x = jax.random.normal(k_x, (B, C, H, W), jnp.float32)

    params = init_params(k_p, C * H * W)
    kparams = fold_and_pack(params)

    out = model_ftt_forward(x, kparams)
    out = jax.block_until_ready(out)

    assert out.shape == (B, 2)
    # matches the same-precision (folded, bf16) reference tightly
    assert jnp.allclose(out, reference_folded(x, kparams), atol=2e-3, rtol=2e-3)
    # matches the original f32 unfolded path within bf16 tolerance
    assert jnp.allclose(out, reference_f32(x, params), atol=2e-2, rtol=2e-2)

    print("KERNEL_OK")
</pallas_src>

<mosaic_0001>
module attributes {stable_mosaic.version = 11 : i64} {
  func.func @_head_kernel(%arg0: i32, %arg1: i32, %arg2: memref<2x1024xf32, #tpu.memory_space<vmem>>, %arg3: memref<1024x128xbf16, #tpu.memory_space<vmem>>, %arg4: memref<1x128xf32, #tpu.memory_space<vmem>>, %arg5: memref<128x128xbf16, #tpu.memory_space<vmem>>, %arg6: memref<1x128xf32, #tpu.memory_space<vmem>>, %arg7: memref<2x128xf32, #tpu.memory_space<vmem>>, %arg8: memref<2x128xf32, #tpu.memory_space<vmem>>) attributes {dimension_semantics = [#tpu.dimension_semantics<parallel>, #tpu.dimension_semantics<arbitrary>], iteration_bounds = array<i64: 1, 1>, scalar_prefetch = 0 : i64, scratch_operands = 1 : i64, tpu.core_type = #tpu.core_type<tc>, window_params = [{transform_indices = @transform_0, window_bounds = array<i64: 2, 1024>}, {transform_indices = @transform_1, window_bounds = array<i64: 1024, 128>}, {pipeline_mode = #tpu.pipeline_mode<synchronous>, transform_indices = @transform_2, window_bounds = array<i64: 1, 128>}, {pipeline_mode = #tpu.pipeline_mode<synchronous>, transform_indices = @transform_3, window_bounds = array<i64: 128, 128>}, {pipeline_mode = #tpu.pipeline_mode<synchronous>, transform_indices = @transform_4, window_bounds = array<i64: 1, 128>}, {transform_indices = @transform_5, window_bounds = array<i64: 2, 128>}]} {
    %c0_i32 = arith.constant 0 : i32
    %0 = arith.cmpi eq, %arg1, %c0_i32 : i32
    %1 = arith.extui %0 : i1 to i32
    %c0_i32_0 = arith.constant 0 : i32
    %2 = arith.cmpi ne, %1, %c0_i32_0 : i32
    scf.if %2 {
      %cst_10 = arith.constant 0.000000e+00 : f32
      %13 = vector.broadcast %cst_10 : f32 to vector<2x128xf32>
      %c0_11 = arith.constant 0 : index
      %c0_12 = arith.constant 0 : index
      %14 = vector.load %arg8[%c0_11, %c0_12] : memref<2x128xf32, #tpu.memory_space<vmem>>, vector<2x128xf32>
      tpu.vector_store %arg8[%c0_11, %c0_12], %13 {strides = array<i32>} : memref<2x128xf32, #tpu.memory_space<vmem>>, vector<2x128xf32>,
    } else {
    }
    %c0 = arith.constant 0 : index
    %c0_1 = arith.constant 0 : index
    %3 = vector.load %arg8[%c0, %c0_1] : memref<2x128xf32, #tpu.memory_space<vmem>>, vector<2x128xf32>
    %c0_2 = arith.constant 0 : index
    %c0_3 = arith.constant 0 : index
    %4 = vector.load %arg2[%c0_2, %c0_3] : memref<2x1024xf32, #tpu.memory_space<vmem>>, vector<2x1024xf32>
    %5 = arith.truncf %4 : vector<2x1024xf32> to vector<2x1024xbf16>
    %c0_4 = arith.constant 0 : index
    %c0_5 = arith.constant 0 : index
    %6 = vector.load %arg3[%c0_4, %c0_5] : memref<1024x128xbf16, #tpu.memory_space<vmem>>, vector<1024x128xbf16>
    %cst = arith.constant dense<0.000000e+00> : vector<2x128xf32>
    %7 = tpu.matmul %5, %6, %cst {dimension_numbers = #tpu.dot_dimension_numbers<[1], [0], [0], [1], [0, 0, 1, 1], [], []>} : vector<2x1024xbf16>, vector<1024x128xbf16>, vector<2x128xf32> -> vector<2x128xf32>
    %8 = arith.addf %3, %7 : vector<2x128xf32>
    %c0_6 = arith.constant 0 : index
    %c0_7 = arith.constant 0 : index
    %9 = vector.load %arg8[%c0_6, %c0_7] : memref<2x128xf32, #tpu.memory_space<vmem>>, vector<2x128xf32>
    tpu.vector_store %arg8[%c0_6, %c0_7], %8 {strides = array<i32>} : memref<2x128xf32, #tpu.memory_space<vmem>>, vector<2x128xf32>,
    %c0_i32_8 = arith.constant 0 : i32
    %10 = arith.cmpi eq, %arg1, %c0_i32_8 : i32
    %11 = arith.extui %10 : i1 to i32
    %c0_i32_9 = arith.constant 0 : i32
    %12 = arith.cmpi ne, %11, %c0_i32_9 : i32
    scf.if %12 {
      %c0_10 = arith.constant 0 : index
      %c0_11 = arith.constant 0 : index
      %13 = vector.load %arg8[%c0_10, %c0_11] : memref<2x128xf32, #tpu.memory_space<vmem>>, vector<2x128xf32>
      %c0_12 = arith.constant 0 : index
      %c0_13 = arith.constant 0 : index
      %14 = vector.load %arg4[%c0_12, %c0_13] : memref<1x128xf32, #tpu.memory_space<vmem>>, vector<1x128xf32>
      %15 = vector.broadcast %14 : vector<1x128xf32> to vector<2x128xf32>
      %16 = arith.addf %13, %15 : vector<2x128xf32>
      %cst_14 = arith.constant 0.000000e+00 : f32
      %17 = vector.broadcast %cst_14 : f32 to vector<2x128xf32>
      %18 = arith.maximumf %16, %17 : vector<2x128xf32>
      %19 = arith.truncf %18 : vector<2x128xf32> to vector<2x128xbf16>
      %c0_15 = arith.constant 0 : index
      %c0_16 = arith.constant 0 : index
      %20 = vector.load %arg5[%c0_15, %c0_16] : memref<128x128xbf16, #tpu.memory_space<vmem>>, vector<128x128xbf16>
      %cst_17 = arith.constant dense<0.000000e+00> : vector<2x128xf32>
      %21 = tpu.matmul %19, %20, %cst_17 {dimension_numbers = #tpu.dot_dimension_numbers<[1], [0], [0], [1], [0, 0, 1, 1], [], []>} : vector<2x128xbf16>, vector<128x128xbf16>, vector<2x128xf32> -> vector<2x128xf32>
      %c0_18 = arith.constant 0 : index
      %c0_19 = arith.constant 0 : index
      %22 = vector.load %arg6[%c0_18, %c0_19] : memref<1x128xf32, #tpu.memory_space<vmem>>, vector<1x128xf32>
      %23 = vector.broadcast %22 : vector<1x128xf32> to vector<2x128xf32>
      %24 = arith.addf %21, %23 : vector<2x128xf32>
      %c0_20 = arith.constant 0 : index
      %c0_21 = arith.constant 0 : index
      %25 = vector.load %arg7[%c0_20, %c0_21] : memref<2x128xf32, #tpu.memory_space<vmem>>, vector<2x128xf32>
      tpu.vector_store %arg7[%c0_20, %c0_21], %24 {strides = array<i32>} : memref<2x128xf32, #tpu.memory_space<vmem>>, vector<2x128xf32>,
    } else {
    }
    return
  }
  func.func @transform_0(%arg0: i32, %arg1: i32) -> (i32, i32) {
    %c0_i32 = arith.constant 0 : i32
    return %arg0, %arg1 : i32, i32
  }
  func.func @transform_1(%arg0: i32, %arg1: i32) -> (i32, i32) {
    %c0_i32 = arith.constant 0 : i32
    %c0_i32_0 = arith.constant 0 : i32
    return %arg1, %c0_i32 : i32, i32
  }
  func.func @transform_2(%arg0: i32, %arg1: i32) -> (i32, i32) {
    %c0_i32 = arith.constant 0 : i32
    %c0_i32_0 = arith.constant 0 : i32
    %c0_i32_1 = arith.constant 0 : i32
    return %c0_i32, %c0_i32_0 : i32, i32
  }
  func.func @transform_3(%arg0: i32, %arg1: i32) -> (i32, i32) {
    %c0_i32 = arith.constant 0 : i32
    %c0_i32_0 = arith.constant 0 : i32
    %c0_i32_1 = arith.constant 0 : i32
    return %c0_i32, %c0_i32_0 : i32, i32
  }
  func.func @transform_4(%arg0: i32, %arg1: i32) -> (i32, i32) {
    %c0_i32 = arith.constant 0 : i32
    %c0_i32_0 = arith.constant 0 : i32
    %c0_i32_1 = arith.constant 0 : i32
    return %c0_i32, %c0_i32_0 : i32, i32
  }
  func.func @transform_5(%arg0: i32, %arg1: i32) -> (i32, i32) {
    %c0_i32 = arith.constant 0 : i32
    %c0_i32_0 = arith.constant 0 : i32
    return %arg0, %c0_i32 : i32, i32
  }
}

</mosaic_0001>

<llo_original>
// kernel: tpu_custom_call.1
$region0: #{tpu_custom_call.1}
  #allocation0 [shape = 'u32[]', space=smem, size = 0x4, offset = 0x4, fixed_abs, tag = 'smem constant byte address 0x4 - core index']
  #allocation1 [shape = 'u32[72,128]{1,0:T(1,128)}', space=vmem, size = 0x9000, scoped, tag = 'internal scratch']
  #allocation2 [shape = 'f32[2,128]{1,0:T(2,128)}', space=vmem, size = 0x400, scoped, tag = 'scratch operand']
  %s0 = inlined_call_operand.hbm [shape: f32[2,1024], index: 0, kind: input, shape index: {}]
  %s1 = inlined_call_operand.hbm [shape: bf16[1024,128], index: 1, kind: input, shape index: {}]
  %s2 = inlined_call_operand.vmem [shape: f32[1,128], index: 2, kind: input, shape index: {}]
  %s3 = inlined_call_operand.hbm [shape: bf16[128,128], index: 3, kind: input, shape index: {}]
  %s4 = inlined_call_operand.vmem [shape: f32[1,128], index: 4, kind: input, shape index: {}]
  %s5 = inlined_call_operand.hbm [shape: f32[2,128], index: 5, kind: output, shape index: {}]
  %s6 = sld [smem:[#allocation0]]
  $region50: #{tpu_custom_call.1} parent=0
    _
  %s8 = ssub.s32 1, %s6
  %s9 = scalar_select 0, %s8, %s6
  $region1: #{tpu_custom_call.1} parent=0
    #allocation3 [shape = 'u8[8192]{0}', space=vmem, size = 0x2000, scoped, tag = 'input window, operand 0, single buffered']
    #allocation4 [shape = 's32[1]{0}', space=sflag, size = 0x4, scoped, tag = 'scoped memory for tpu_custom_call.1']
    #allocation5 [shape = 's32[1]{0}', space=sflag, size = 0x4, scoped, tag = 'scoped memory for tpu_custom_call.1']
    #allocation6 [shape = 'u8[262144]{0}', space=vmem, size = 0x40000, scoped, tag = 'input window, operand 1, single buffered']
    #allocation7 [shape = 's32[1]{0}', space=sflag, size = 0x4, scoped, tag = 'scoped memory for tpu_custom_call.1']
    #allocation8 [shape = 'u8[32768]{0}', space=vmem, size = 0x8000, scoped, tag = 'input window, operand 3, single buffered']
    #allocation9 [shape = 'u8[1024]{0}', space=vmem, size = 0x400, scoped, tag = 'output window, operand 0, single buffered']
    %10 = vsyncpa [#allocation4], 0
    %11 = vsyncpa [#allocation7], 0
    %12 = vsyncpa [#allocation5], 0
    // Predicated region
    $region2: #{tpu_custom_call.1} parent=1 // pred_check
      _
    $region3: #{tpu_custom_call.1} parent=1 // pred_check_branch
      %14 = sbr.rel (0) target = $region5
    $region4: #{tpu_custom_call.1} parent=1 // pred_region
      %16 = vsyncadd [#allocation4], 0
      %s18 = sshll.u32 %s0, 4
      %s19 = int_to_ptr.hbm [resolvable:$true] %s18
      %s20 = sshll.u32 [#allocation3], 4
      %s21 = int_to_ptr.vmem [resolvable:$true] %s20
      %23 = dma.hbm_to_vmem [thread:$0]  %s19, 256, %s21, [#allocation4]
    $region5: #{tpu_custom_call.1} parent=1 // pred_fallthru
      _
    // Predicated region
    $region6: #{tpu_custom_call.1} parent=1 // pred_check
      _
    $region7: #{tpu_custom_call.1} parent=1 // pred_check_branch
      %25 = sbr.rel (0) target = $region9
    $region8: #{tpu_custom_call.1} parent=1 // pred_region
      %27 = vsyncadd [#allocation7], 0
      %s28 = sshll.u32 %s1, 4
      %s29 = int_to_ptr.hbm [resolvable:$true] %s28
      %s30 = sshll.u32 [#allocation6], 4
      %s31 = int_to_ptr.vmem [resolvable:$true] %s30
      %36 = dma.hbm_to_vmem [thread:$0]  %s29, 8192, %s31, [#allocation7], 64, 64, 4
    $region9: #{tpu_custom_call.1} parent=1 // pred_fallthru
      _
    // Predicated region
    $region10: #{tpu_custom_call.1} parent=1 // pred_check
      _
    $region11: #{tpu_custom_call.1} parent=1 // pred_check_branch
      %38 = sbr.rel (0) target = $region13
    $region12: #{tpu_custom_call.1} parent=1 // pred_region
      _
    $region13: #{tpu_custom_call.1} parent=1 // pred_fallthru
      _
    // Predicated region
    $region14: #{tpu_custom_call.1} parent=1 // pred_check
      _
    $region15: #{tpu_custom_call.1} parent=1 // pred_check_branch
      %40 = sbr.rel (0) target = $region17
    $region16: #{tpu_custom_call.1} parent=1 // pred_region
      %42 = vsyncadd [#allocation7], 0
      %s43 = sshll.u32 %s3, 4
      %s44 = int_to_ptr.hbm [resolvable:$true] %s43
      %s45 = sshll.u32 [#allocation8], 4
      %s46 = int_to_ptr.vmem [resolvable:$true] %s45
      %51 = dma.hbm_to_vmem [thread:$0]  %s44, 1024, %s46, [#allocation7], 64, 64, 4
    $region17: #{tpu_custom_call.1} parent=1 // pred_fallthru
      _
    // Predicated region
    $region18: #{tpu_custom_call.1} parent=1 // pred_check
      _
    $region19: #{tpu_custom_call.1} parent=1 // pred_check_branch
      %53 = sbr.rel (0) target = $region21
    $region20: #{tpu_custom_call.1} parent=1 // pred_region
      _
    $region21: #{tpu_custom_call.1} parent=1 // pred_fallthru
      _
    // Predicated region
    $region22: #{tpu_custom_call.1} parent=1 // pred_check
      _
    $region23: #{tpu_custom_call.1} parent=1 // pred_check_branch
      %55 = sbr.rel (0) target = $region25
    $region24: #{tpu_custom_call.1} parent=1 // pred_region
      %57 = dma.done [#allocation4], 256
    $region25: #{tpu_custom_call.1} parent=1 // pred_fallthru
      _
    // Predicated region
    $region26: #{tpu_custom_call.1} parent=1 // pred_check
      _
    $region27: #{tpu_custom_call.1} parent=1 // pred_check_branch
      %59 = sbr.rel (0) target = $region29
    $region28: #{tpu_custom_call.1} parent=1 // pred_region
      %61 = dma.done [#allocation7], 8192
    $region29: #{tpu_custom_call.1} parent=1 // pred_fallthru
      _
    // Predicated region
    $region30: #{tpu_custom_call.1} parent=1 // pred_check
      _
    $region31: #{tpu_custom_call.1} parent=1 // pred_check_branch
      %63 = sbr.rel (0) target = $region33
    $region32: #{tpu_custom_call.1} parent=1 // pred_region
      %65 = dma.done [#allocation7], 1024
    $region33: #{tpu_custom_call.1} parent=1 // pred_fallthru
      _
    %p66 = scmp.eq.s32.totalorder 0, 0
    // Predicated region
    $region34: #{tpu_custom_call.1} parent=1 // pred_check
      %p67 = pneg %p66
    $region35: #{tpu_custom_call.1} parent=1 // pred_check_branch
      %69 = sbr.rel (%p67) target = $region37
    $region36: #{tpu_custom_call.1} parent=1 // pred_region
      %70 = vst [vmem:[#allocation2] sm:$0x3] 0.0
    $region37: #{tpu_custom_call.1} parent=1 // pred_fallthru
      _
    %v71 = vld [vmem:[#allocation2] sm:$0x3]
    %v72 = vld [vmem:[#allocation3] sm:$0xff]
    %v73 = vld [vmem:[#allocation3 + $0x8] sm:$0xff]
    %76 = vst [vmem:[#allocation1] ss:$4 sm:$0xff] %v72
    %s77 = scalar_lea.vmem [#allocation1], 32
    %78 = vst [vmem:[%s77] ss:$4 sm:$0xff] %v73
    %v79 = vld.sshfl [vmem:[#allocation1] sm:$0xff pattern:$0x73625140]
    %v80 = vld.sshfl [vmem:[#allocation1 + $0x8] sm:$0xff pattern:$0x73625140]
    %v81 = vld.sshfl [vmem:[#allocation1 + $0x10] sm:$0xff pattern:$0x73625140]
    %v82 = vld.sshfl [vmem:[#allocation1 + $0x18] sm:$0xff pattern:$0x73625140]
    %v83 = vld.sshfl [vmem:[#allocation1 + $0x20] sm:$0xff pattern:$0x73625140]
    %v84 = vld.sshfl [vmem:[#allocation1 + $0x28] sm:$0xff pattern:$0x73625140]
    %v85 = vld.sshfl [vmem:[#allocation1 + $0x30] sm:$0xff pattern:$0x73625140]
    %v86 = vld.sshfl [vmem:[#allocation1 + $0x38] sm:$0xff pattern:$0x73625140]
    %v95 = vpack.c.bf16 %v79, %v79
    %v96 = vpack.c.bf16 %v80, %v80
    %v97 = vpack.c.bf16 %v81, %v81
    %v98 = vpack.c.bf16 %v82, %v82
    %v99 = vpack.c.bf16 %v83, %v83
    %v100 = vpack.c.bf16 %v84, %v84
    %v101 = vpack.c.bf16 %v85, %v85
    %v102 = vpack.c.bf16 %v86, %v86
    %v103 = vld [vmem:[#allocation6] sm:$0xf]
    %v104 = vld [vmem:[#allocation6 + $0x4] sm:$0xf]
    %v105 = vld [vmem:[#allocation6 + $0x8] sm:$0xf]
    %v106 = vld [vmem:[#allocation6 + $0xc] sm:$0xf]
    %v107 = vld [vmem:[#allocation6 + $0x10] sm:$0xf]
    %v108 = vld [vmem:[#allocation6 + $0x14] sm:$0xf]
    %v109 = vld [vmem:[#allocation6 + $0x18] sm:$0xf]
    %v110 = vld [vmem:[#allocation6 + $0x1c] sm:$0xf]
    %v111 = vld [vmem:[#allocation6 + $0x20] sm:$0xf]
    %v112 = vld [vmem:[#allocation6 + $0x24] sm:$0xf]
    %v113 = vld [vmem:[#allocation6 + $0x28] sm:$0xf]
    %v114 = vld [vmem:[#allocation6 + $0x2c] sm:$0xf]
    %v115 = vld [vmem:[#allocation6 + $0x30] sm:$0xf]
    %v116 = vld [vmem:[#allocation6 + $0x34] sm:$0xf]
    %v117 = vld [vmem:[#allocation6 + $0x38] sm:$0xf]
    %v118 = vld [vmem:[#allocation6 + $0x3c] sm:$0xf]
    %v119 = vld [vmem:[#allocation6 + $0x40] sm:$0xf]
    %v120 = vld [vmem:[#allocation6 + $0x44] sm:$0xf]
    %v121 = vld [vmem:[#allocation6 + $0x48] sm:$0xf]
    %v122 = vld [vmem:[#allocation6 + $0x4c] sm:$0xf]
    %v123 = vld [vmem:[#allocation6 + $0x50] sm:$0xf]
    %v124 = vld [vmem:[#allocation6 + $0x54] sm:$0xf]
    %v125 = vld [vmem:[#allocation6 + $0x58] sm:$0xf]
    %v126 = vld [vmem:[#allocation6 + $0x5c] sm:$0xf]
    %v127 = vld [vmem:[#allocation6 + $0x60] sm:$0xf]
    %v128 = vld [vmem:[#allocation6 + $0x64] sm:$0xf]
    %v129 = vld [vmem:[#allocation6 + $0x68] sm:$0xf]
    %v130 = vld [vmem:[#allocation6 + $0x6c] sm:$0xf]
    %v131 = vld [vmem:[#allocation6 + $0x70] sm:$0xf]
    %v132 = vld [vmem:[#allocation6 + $0x74] sm:$0xf]
    %v133 = vld [vmem:[#allocation6 + $0x78] sm:$0xf]
    %v134 = vld [vmem:[#allocation6 + $0x7c] sm:$0xf]
    %v135 = vld [vmem:[#allocation6 + $0x80] sm:$0xf]
    %v136 = vld [vmem:[#allocation6 + $0x84] sm:$0xf]
    %v137 = vld [vmem:[#allocation6 + $0x88] sm:$0xf]
    %v138 = vld [vmem:[#allocation6 + $0x8c] sm:$0xf]
    %v139 = vld [vmem:[#allocation6 + $0x90] sm:$0xf]
    %v140 = vld [vmem:[#allocation6 + $0x94] sm:$0xf]
    %v141 = vld [vmem:[#allocation6 + $0x98] sm:$0xf]
    %v142 = vld [vmem:[#allocation6 + $0x9c] sm:$0xf]
    %v143 = vld [vmem:[#allocation6 + $0xa0] sm:$0xf]
    %v144 = vld [vmem:[#allocation6 + $0xa4] sm:$0xf]
    %v145 = vld [vmem:[#allocation6 + $0xa8] sm:$0xf]
    %v146 = vld [vmem:[#allocation6 + $0xac] sm:$0xf]
    %v147 = vld [vmem:[#allocation6 + $0xb0] sm:$0xf]
    %v148 = vld [vmem:[#allocation6 + $0xb4] sm:$0xf]
    %v149 = vld [vmem:[#allocation6 + $0xb8] sm:$0xf]
    %v150 = vld [vmem:[#allocation6 + $0xbc] sm:$0xf]
    %v151 = vld [vmem:[#allocation6 + $0xc0] sm:$0xf]
    %v152 = vld [vmem:[#allocation6 + $0xc4] sm:$0xf]
    %v153 = vld [vmem:[#allocation6 + $0xc8] sm:$0xf]
    %v154 = vld [vmem:[#allocation6 + $0xcc] sm:$0xf]
    %v155 = vld [vmem:[#allocation6 + $0xd0] sm:$0xf]
    %v156 = vld [vmem:[#allocation6 + $0xd4] sm:$0xf]
    %v157 = vld [vmem:[#allocation6 + $0xd8] sm:$0xf]
    %v158 = vld [vmem:[#allocation6 + $0xdc] sm:$0xf]
    %v159 = vld [vmem:[#allocation6 + $0xe0] sm:$0xf]
    %v160 = vld [vmem:[#allocation6 + $0xe4] sm:$0xf]
    %v161 = vld [vmem:[#allocation6 + $0xe8] sm:$0xf]
    %v162 = vld [vmem:[#allocation6 + $0xec] sm:$0xf]
    %v163 = vld [vmem:[#allocation6 + $0xf0] sm:$0xf]
    %v164 = vld [vmem:[#allocation6 + $0xf4] sm:$0xf]
    %v165 = vld [vmem:[#allocation6 + $0xf8] sm:$0xf]
    %v166 = vld [vmem:[#allocation6 + $0xfc] sm:$0xf]
    %v167 = vld [vmem:[#allocation6 + $0x100] sm:$0xf]
    %v168 = vld [vmem:[#allocation6 + $0x104] sm:$0xf]
    %v169 = vld [vmem:[#allocation6 + $0x108] sm:$0xf]
    %v170 = vld [vmem:[#allocation6 + $0x10c] sm:$0xf]
    %v171 = vld [vmem:[#allocation6 + $0x110] sm:$0xf]
    %v172 = vld [vmem:[#allocation6 + $0x114] sm:$0xf]
    %v173 = vld [vmem:[#allocation6 + $0x118] sm:$0xf]
    %v174 = vld [vmem:[#allocation6 + $0x11c] sm:$0xf]
    %v175 = vld [vmem:[#allocation6 + $0x120] sm:$0xf]
    %v176 = vld [vmem:[#allocation6 + $0x124] sm:$0xf]
    %v177 = vld [vmem:[#allocation6 + $0x128] sm:$0xf]
    %v178 = vld [vmem:[#allocation6 + $0x12c] sm:$0xf]
    %v179 = vld [vmem:[#allocation6 + $0x130] sm:$0xf]
    %v180 = vld [vmem:[#allocation6 + $0x134] sm:$0xf]
    %v181 = vld [vmem:[#allocation6 + $0x138] sm:$0xf]
    %v182 = vld [vmem:[#allocation6 + $0x13c] sm:$0xf]
    %v183 = vld [vmem:[#allocation6 + $0x140] sm:$0xf]
    %v184 = vld [vmem:[#allocation6 + $0x144] sm:$0xf]
    %v185 = vld [vmem:[#allocation6 + $0x148] sm:$0xf]
    %v186 = vld [vmem:[#allocation6 + $0x14c] sm:$0xf]
    %v187 = vld [vmem:[#allocation6 + $0x150] sm:$0xf]
    %v188 = vld [vmem:[#allocation6 + $0x154] sm:$0xf]
    %v189 = vld [vmem:[#allocation6 + $0x158] sm:$0xf]
    %v190 = vld [vmem:[#allocation6 + $0x15c] sm:$0xf]
    %v191 = vld [vmem:[#allocation6 + $0x160] sm:$0xf]
    %v192 = vld [vmem:[#allocation6 + $0x164] sm:$0xf]
    %v193 = vld [vmem:[#allocation6 + $0x168] sm:$0xf]
    %v194 = vld [vmem:[#allocation6 + $0x16c] sm:$0xf]
    %v195 = vld [vmem:[#allocation6 + $0x170] sm:$0xf]
    %v196 = vld [vmem:[#allocation6 + $0x174] sm:$0xf]
    %v197 = vld [vmem:[#allocation6 + $0x178] sm:$0xf]
    %v198 = vld [vmem:[#allocation6 + $0x17c] sm:$0xf]
    %v199 = vld [vmem:[#allocation6 + $0x180] sm:$0xf]
    %v200 = vld [vmem:[#allocation6 + $0x184] sm:$0xf]
    %v201 = vld [vmem:[#allocation6 + $0x188] sm:$0xf]
    %v202 = vld [vmem:[#allocation6 + $0x18c] sm:$0xf]
    %v203 = vld [vmem:[#allocation6 + $0x190] sm:$0xf]
    %v204 = vld [vmem:[#allocation6 + $0x194] sm:$0xf]
    %v205 = vld [vmem:[#allocation6 + $0x198] sm:$0xf]
    %v206 = vld [vmem:[#allocation6 + $0x19c] sm:$0xf]
    %v207 = vld [vmem:[#allocation6 + $0x1a0] sm:$0xf]
    %v208 = vld [vmem:[#allocation6 + $0x1a4] sm:$0xf]
    %v209 = vld [vmem:[#allocation6 + $0x1a8] sm:$0xf]
    %v210 = vld [vmem:[#allocation6 + $0x1ac] sm:$0xf]
    %v211 = vld [vmem:[#allocation6 + $0x1b0] sm:$0xf]
    %v212 = vld [vmem:[#allocation6 + $0x1b4] sm:$0xf]
    %v213 = vld [vmem:[#allocation6 + $0x1b8] sm:$0xf]
    %v214 = vld [vmem:[#allocation6 + $0x1bc] sm:$0xf]
    %v215 = vld [vmem:[#allocation6 + $0x1c0] sm:$0xf]
    %v216 = vld [vmem:[#allocation6 + $0x1c4] sm:$0xf]
    %v217 = vld [vmem:[#allocation6 + $0x1c8] sm:$0xf]
    %v218 = vld [vmem:[#allocation6 + $0x1cc] sm:$0xf]
    %v219 = vld [vmem:[#allocation6 + $0x1d0] sm:$0xf]
    %v220 = vld [vmem:[#allocation6 + $0x1d4] sm:$0xf]
    %v221 = vld [vmem:[#allocation6 + $0x1d8] sm:$0xf]
    %v222 = vld [vmem:[#allocation6 + $0x1dc] sm:$0xf]
    %v223 = vld [vmem:[#allocation6 + $0x1e0] sm:$0xf]
    %v224 = vld [vmem:[#allocation6 + $0x1e4] sm:$0xf]
    %v225 = vld [vmem:[#allocation6 + $0x1e8] sm:$0xf]
    %v226 = vld [vmem:[#allocation6 + $0x1ec] sm:$0xf]
    %v227 = vld [vmem:[#allocation6 + $0x1f0] sm:$0xf]
    %v228 = vld [vmem:[#allocation6 + $0x1f4] sm:$0xf]
    %v229 = vld [vmem:[#allocation6 + $0x1f8] sm:$0xf]
    %v230 = vld [vmem:[#allocation6 + $0x1fc] sm:$0xf]
    %v359 = vunpack.c.l.b16 %v103
    %v360 = vunpack.c.l.b16 %v104
    %v361 = vunpack.c.l.b16 %v105
    %v362 = vunpack.c.l.b16 %v106
    %v363 = vunpack.c.l.b16 %v107
    %v364 = vunpack.c.l.b16 %v108
    %v365 = vunpack.c.l.b16 %v109
    %v366 = vunpack.c.l.b16 %v110
    %v367 = vunpack.c.l.b16 %v111
    %v368 = vunpack.c.l.b16 %v112
    %v369 = vunpack.c.l.b16 %v113
    %v370 = vunpack.c.l.b16 %v114
    %v371 = vunpack.c.l.b16 %v115
    %v372 = vunpack.c.l.b16 %v116
    %v373 = vunpack.c.l.b16 %v117
    %v374 = vunpack.c.l.b16 %v118
    %v375 = vunpack.c.l.b16 %v119
    %v376 = vunpack.c.l.b16 %v120
    %v377 = vunpack.c.l.b16 %v121
    %v378 = vunpack.c.l.b16 %v122
    %v379 = vunpack.c.l.b16 %v123
    %v380 = vunpack.c.l.b16 %v124
    %v381 = vunpack.c.l.b16 %v125
    %v382 = vunpack.c.l.b16 %v126
    %v383 = vunpack.c.l.b16 %v127
    %v384 = vunpack.c.l.b16 %v128
    %v385 = vunpack.c.l.b16 %v129
    %v386 = vunpack.c.l.b16 %v130
    %v387 = vunpack.c.l.b16 %v131
    %v388 = vunpack.c.l.b16 %v132
    %v389 = vunpack.c.l.b16 %v133
    %v390 = vunpack.c.l.b16 %v134
    %v391 = vunpack.c.l.b16 %v135
    %v392 = vunpack.c.l.b16 %v136
    %v393 = vunpack.c.l.b16 %v137
    %v394 = vunpack.c.l.b16 %v138
    %v395 = vunpack.c.l.b16 %v139
    %v396 = vunpack.c.l.b16 %v140
    %v397 = vunpack.c.l.b16 %v141
    %v398 = vunpack.c.l.b16 %v142
    %v399 = vunpack.c.l.b16 %v143
    %v400 = vunpack.c.l.b16 %v144
    %v401 = vunpack.c.l.b16 %v145
    %v402 = vunpack.c.l.b16 %v146
    %v403 = vunpack.c.l.b16 %v147
    %v404 = vunpack.c.l.b16 %v148
    %v405 = vunpack.c.l.b16 %v149
    %v406 = vunpack.c.l.b16 %v150
    %v407 = vunpack.c.l.b16 %v151
    %v408 = vunpack.c.l.b16 %v152
    %v409 = vunpack.c.l.b16 %v153
    %v410 = vunpack.c.l.b16 %v154
    %v411 = vunpack.c.l.b16 %v155
    %v412 = vunpack.c.l.b16 %v156
    %v413 = vunpack.c.l.b16 %v157
    %v414 = vunpack.c.l.b16 %v158
    %v415 = vunpack.c.l.b16 %v159
    %v416 = vunpack.c.l.b16 %v160
    %v417 = vunpack.c.l.b16 %v161
    %v418 = vunpack.c.l.b16 %v162
    %v419 = vunpack.c.l.b16 %v163
    %v420 = vunpack.c.l.b16 %v164
    %v421 = vunpack.c.l.b16 %v165
    %v422 = vunpack.c.l.b16 %v166
    %v423 = vunpack.c.l.b16 %v167
    %v424 = vunpack.c.l.b16 %v168
    %v425 = vunpack.c.l.b16 %v169
    %v426 = vunpack.c.l.b16 %v170
    %v427 = vunpack.c.l.b16 %v171
    %v428 = vunpack.c.l.b16 %v172
    %v429 = vunpack.c.l.b16 %v173
    %v430 = vunpack.c.l.b16 %v174
    %v431 = vunpack.c.l.b16 %v175
    %v432 = vunpack.c.l.b16 %v176
    %v433 = vunpack.c.l.b16 %v177
    %v434 = vunpack.c.l.b16 %v178
    %v435 = vunpack.c.l.b16 %v179
    %v436 = vunpack.c.l.b16 %v180
    %v437 = vunpack.c.l.b16 %v181
    %v438 = vunpack.c.l.b16 %v182
    %v439 = vunpack.c.l.b16 %v183
    %v440 = vunpack.c.l.b16 %v184
    %v441 = vunpack.c.l.b16 %v185
    %v442 = vunpack.c.l.b16 %v186
    %v443 = vunpack.c.l.b16 %v187
    %v444 = vunpack.c.l.b16 %v188
    %v445 = vunpack.c.l.b16 %v189
    %v446 = vunpack.c.l.b16 %v190
    %v447 = vunpack.c.l.b16 %v191
    %v448 = vunpack.c.l.b16 %v192
    %v449 = vunpack.c.l.b16 %v193
    %v450 = vunpack.c.l.b16 %v194
    %v451 = vunpack.c.l.b16 %v195
    %v452 = vunpack.c.l.b16 %v196
    %v453 = vunpack.c.l.b16 %v197
    %v454 = vunpack.c.l.b16 %v198
    %v455 = vunpack.c.l.b16 %v199
    %v456 = vunpack.c.l.b16 %v200
    %v457 = vunpack.c.l.b16 %v201
    %v458 = vunpack.c.l.b16 %v202
    %v459 = vunpack.c.l.b16 %v203
    %v460 = vunpack.c.l.b16 %v204
    %v461 = vunpack.c.l.b16 %v205
    %v462 = vunpack.c.l.b16 %v206
    %v463 = vunpack.c.l.b16 %v207
    %v464 = vunpack.c.l.b16 %v208
    %v465 = vunpack.c.l.b16 %v209
    %v466 = vunpack.c.l.b16 %v210
    %v467 = vunpack.c.l.b16 %v211
    %v468 = vunpack.c.l.b16 %v212
    %v469 = vunpack.c.l.b16 %v213
    %v470 = vunpack.c.l.b16 %v214
    %v471 = vunpack.c.l.b16 %v215
    %v472 = vunpack.c.l.b16 %v216
    %v473 = vunpack.c.l.b16 %v217
    %v474 = vunpack.c.l.b16 %v218
    %v475 = vunpack.c.l.b16 %v219
    %v476 = vunpack.c.l.b16 %v220
    %v477 = vunpack.c.l.b16 %v221
    %v478 = vunpack.c.l.b16 %v222
    %v479 = vunpack.c.l.b16 %v223
    %v480 = vunpack.c.l.b16 %v224
    %v481 = vunpack.c.l.b16 %v225
    %v482 = vunpack.c.l.b16 %v226
    %v483 = vunpack.c.l.b16 %v227
    %v484 = vunpack.c.l.b16 %v228
    %v485 = vunpack.c.l.b16 %v229
    %v486 = vunpack.c.l.b16 %v230
    %v487 = vpack.c.b16 %v360, %v359
    %v488 = vpack.c.b16 %v362, %v361
    %v489 = vpack.c.b16 %v364, %v363
    %v490 = vpack.c.b16 %v366, %v365
    %v491 = vpack.c.b16 %v368, %v367
    %v492 = vpack.c.b16 %v370, %v369
    %v493 = vpack.c.b16 %v372, %v371
    %v494 = vpack.c.b16 %v374, %v373
    %v495 = vpack.c.b16 %v376, %v375
    %v496 = vpack.c.b16 %v378, %v377
    %v497 = vpack.c.b16 %v380, %v379
    %v498 = vpack.c.b16 %v382, %v381
    %v499 = vpack.c.b16 %v384, %v383
    %v500 = vpack.c.b16 %v386, %v385
    %v501 = vpack.c.b16 %v388, %v387
    %v502 = vpack.c.b16 %v390, %v389
    %v503 = vpack.c.b16 %v392, %v391
    %v504 = vpack.c.b16 %v394, %v393
    %v505 = vpack.c.b16 %v396, %v395
    %v506 = vpack.c.b16 %v398, %v397
    %v507 = vpack.c.b16 %v400, %v399
    %v508 = vpack.c.b16 %v402, %v401
    %v509 = vpack.c.b16 %v404, %v403
    %v510 = vpack.c.b16 %v406, %v405
    %v511 = vpack.c.b16 %v408, %v407
    %v512 = vpack.c.b16 %v410, %v409
    %v513 = vpack.c.b16 %v412, %v411
    %v514 = vpack.c.b16 %v414, %v413
    %v515 = vpack.c.b16 %v416, %v415
    %v516 = vpack.c.b16 %v418, %v417
    %v517 = vpack.c.b16 %v420, %v419
    %v518 = vpack.c.b16 %v422, %v421
    %v519 = vpack.c.b16 %v424, %v423
    %v520 = vpack.c.b16 %v426, %v425
    %v521 = vpack.c.b16 %v428, %v427
    %v522 = vpack.c.b16 %v430, %v429
    %v523 = vpack.c.b16 %v432, %v431
    %v524 = vpack.c.b16 %v434, %v433
    %v525 = vpack.c.b16 %v436, %v435
    %v526 = vpack.c.b16 %v438, %v437
    %v527 = vpack.c.b16 %v440, %v439
    %v528 = vpack.c.b16 %v442, %v441
    %v529 = vpack.c.b16 %v444, %v443
    %v530 = vpack.c.b16 %v446, %v445
    %v531 = vpack.c.b16 %v448, %v447
    %v532 = vpack.c.b16 %v450, %v449
    %v533 = vpack.c.b16 %v452, %v451
    %v534 = vpack.c.b16 %v454, %v453
    %v535 = vpack.c.b16 %v456, %v455
    %v536 = vpack.c.b16 %v458, %v457
    %v537 = vpack.c.b16 %v460, %v459
    %v538 = vpack.c.b16 %v462, %v461
    %v539 = vpack.c.b16 %v464, %v463
    %v540 = vpack.c.b16 %v466, %v465
    %v541 = vpack.c.b16 %v468, %v467
    %v542 = vpack.c.b16 %v470, %v469
    %v543 = vpack.c.b16 %v472, %v471
    %v544 = vpack.c.b16 %v474, %v473
    %v545 = vpack.c.b16 %v476, %v475
    %v546 = vpack.c.b16 %v478, %v477
    %v547 = vpack.c.b16 %v480, %v479
    %v548 = vpack.c.b16 %v482, %v481
    %v549 = vpack.c.b16 %v484, %v483
    %v550 = vpack.c.b16 %v486, %v485
    %615 = vmatpush.bf16.msra.mxu0 %v494
    %616 = vmatpush.bf16.msra.mxu0 %v493
    %617 = vmatpush.bf16.msra.mxu0 %v492
    %618 = vmatpush.bf16.msra.mxu0 %v491
    %619 = vmatpush.bf16.msra.mxu0 %v490
    %620 = vmatpush.bf16.msra.mxu0 %v489
    %621 = vmatpush.bf16.msra.mxu0 %v488
    %622 = vmatpush.bf16.msra.mxu0 %v487
    %623 = vmatmul.bf16.gmra.mxu0 %v95
    %v624 = vpop.f32.mrf.mxu0
    %v625 = vadd.f32 0.0, %v624
    %v626 = vpop.f32.mrf.mxu0
    %627 = vdwg.mxu0
    %628 = vmatpush.bf16.msra.mxu0 %v502
    %629 = vmatpush.bf16.msra.mxu0 %v501
    %630 = vmatpush.bf16.msra.mxu0 %v500
    %631 = vmatpush.bf16.msra.mxu0 %v499
    %632 = vmatpush.bf16.msra.mxu0 %v498
    %633 = vmatpush.bf16.msra.mxu0 %v497
    %634 = vmatpush.bf16.msra.mxu0 %v496
    %635 = vmatpush.bf16.msra.mxu0 %v495
    %636 = vmatmul.bf16.gmra.mxu0 %v96
    %v637 = vpop.f32.mrf.mxu0
    %v638 = vadd.f32 %v625, %v637
    %v639 = vpop.f32.mrf.mxu0
    %640 = vdwg.mxu0
    %641 = vmatpush.bf16.msra.mxu0 %v510
    %642 = vmatpush.bf16.msra.mxu0 %v509
    %643 = vmatpush.bf16.msra.mxu0 %v508
    %644 = vmatpush.bf16.msra.mxu0 %v507
    %645 = vmatpush.bf16.msra.mxu0 %v506
    %646 = vmatpush.bf16.msra.mxu0 %v505
    %647 = vmatpush.bf16.msra.mxu0 %v504
    %648 = vmatpush.bf16.msra.mxu0 %v503
    %649 = vmatmul.bf16.gmra.mxu0 %v97
    %v650 = vpop.f32.mrf.mxu0
    %v651 = vadd.f32 %v638, %v650
    %v652 = vpop.f32.mrf.mxu0
    %653 = vdwg.mxu0
    %654 = vmatpush.bf16.msra.mxu0 %v518
    %655 = vmatpush.bf16.msra.mxu0 %v517
    %656 = vmatpush.bf16.msra.mxu0 %v516
    %657 = vmatpush.bf16.msra.mxu0 %v515
    %658 = vmatpush.bf16.msra.mxu0 %v514
    %659 = vmatpush.bf16.msra.mxu0 %v513
    %660 = vmatpush.bf16.msra.mxu0 %v512
    %661 = vmatpush.bf16.msra.mxu0 %v511
    %662 = vmatmul.bf16.gmra.mxu0 %v98
    %v663 = vpop.f32.mrf.mxu0
    %v664 = vadd.f32 %v651, %v663
    %v665 = vpop.f32.mrf.mxu0
    %666 = vdwg.mxu0
    %667 = vmatpush.bf16.msra.mxu0 %v526
    %668 = vmatpush.bf16.msra.mxu0 %v525
    %669 = vmatpush.bf16.msra.mxu0 %v524
    %670 = vmatpush.bf16.msra.mxu0 %v523
    %671 = vmatpush.bf16.msra.mxu0 %v522
    %672 = vmatpush.bf16.msra.mxu0 %v521
    %673 = vmatpush.bf16.msra.mxu0 %v520
    %674 = vmatpush.bf16.msra.mxu0 %v519
    %675 = vmatmul.bf16.gmra.mxu0 %v99
    %v676 = vpop.f32.mrf.mxu0
    %v677 = vadd.f32 %v664, %v676
    %v678 = vpop.f32.mrf.mxu0
    %679 = vdwg.mxu0
    %680 = vmatpush.bf16.msra.mxu0 %v534
    %681 = vmatpush.bf16.msra.mxu0 %v533
    %682 = vmatpush.bf16.msra.mxu0 %v532
    %683 = vmatpush.bf16.msra.mxu0 %v531
    %684 = vmatpush.bf16.msra.mxu0 %v530
    %685 = vmatpush.bf16.msra.mxu0 %v529
    %686 = vmatpush.bf16.msra.mxu0 %v528
    %687 = vmatpush.bf16.msra.mxu0 %v527
    %688 = vmatmul.bf16.gmra.mxu0 %v100
    %v689 = vpop.f32.mrf.mxu0
    %v690 = vadd.f32 %v677, %v689
    %v691 = vpop.f32.mrf.mxu0
    %692 = vdwg.mxu0
    %693 = vmatpush.bf16.msra.mxu0 %v542
    %694 = vmatpush.bf16.msra.mxu0 %v541
    %695 = vmatpush.bf16.msra.mxu0 %v540
    %696 = vmatpush.bf16.msra.mxu0 %v539
    %697 = vmatpush.bf16.msra.mxu0 %v538
    %698 = vmatpush.bf16.msra.mxu0 %v537
    %699 = vmatpush.bf16.msra.mxu0 %v536
    %700 = vmatpush.bf16.msra.mxu0 %v535
    %701 = vmatmul.bf16.gmra.mxu0 %v101
    %v702 = vpop.f32.mrf.mxu0
    %v703 = vadd.f32 %v690, %v702
    %v704 = vpop.f32.mrf.mxu0
    %705 = vdwg.mxu0
    %706 = vmatpush.bf16.msra.mxu0 %v550
    %707 = vmatpush.bf16.msra.mxu0 %v549
    %708 = vmatpush.bf16.msra.mxu0 %v548
    %709 = vmatpush.bf16.msra.mxu0 %v547
    %710 = vmatpush.bf16.msra.mxu0 %v546
    %711 = vmatpush.bf16.msra.mxu0 %v545
    %712 = vmatpush.bf16.msra.mxu0 %v544
    %713 = vmatpush.bf16.msra.mxu0 %v543
    %714 = vmatmul.bf16.gmra.mxu0 %v102
    %v715 = vpop.f32.mrf.mxu0
    %v716 = vadd.f32 %v703, %v715
    %v717 = vpop.f32.mrf.mxu0
    %718 = vdwg.mxu0
    %v719 = vadd.f32 %v71, %v716
    %720 = vst [vmem:[#allocation2] sm:$0x3] %v719
    // Predicated region
    $region38: #{tpu_custom_call.1} parent=1 // pred_check
      %p721 = pneg %p66
    $region39: #{tpu_custom_call.1} parent=1 // pred_check_branch
      %723 = sbr.rel (%p721) target = $region41
    $region40: #{tpu_custom_call.1} parent=1 // pred_region
      %v724 = vld [vmem:[#allocation2] sm:$0x3]
      %v725 = vld [vmem:[%s2] sm:$0x1]
      %v727 = vperm.slane %v725, 0
      %v729 = vadd.f32 %v724, %v727
      %v730 = vmax.f32 %v729, 0.0
      %v731 = vpack.c.bf16 %v730, %v730
      %v732 = vld [vmem:[#allocation8] sm:$0xf]
      %v733 = vld [vmem:[#allocation8 + $0x4] sm:$0xf]
      %v734 = vld [vmem:[#allocation8 + $0x8] sm:$0xf]
      %v735 = vld [vmem:[#allocation8 + $0xc] sm:$0xf]
      %v736 = vld [vmem:[#allocation8 + $0x10] sm:$0xf]
      %v737 = vld [vmem:[#allocation8 + $0x14] sm:$0xf]
      %v738 = vld [vmem:[#allocation8 + $0x18] sm:$0xf]
      %v739 = vld [vmem:[#allocation8 + $0x1c] sm:$0xf]
      %v740 = vld [vmem:[#allocation8 + $0x20] sm:$0xf]
      %v741 = vld [vmem:[#allocation8 + $0x24] sm:$0xf]
      %v742 = vld [vmem:[#allocation8 + $0x28] sm:$0xf]
      %v743 = vld [vmem:[#allocation8 + $0x2c] sm:$0xf]
      %v744 = vld [vmem:[#allocation8 + $0x30] sm:$0xf]
      %v745 = vld [vmem:[#allocation8 + $0x34] sm:$0xf]
      %v746 = vld [vmem:[#allocation8 + $0x38] sm:$0xf]
      %v747 = vld [vmem:[#allocation8 + $0x3c] sm:$0xf]
      %v748 = vld [vmem:[%s4] sm:$0x1]
      %v750 = vperm.slane %v748, 0
      %v768 = vunpack.c.l.b16 %v732
      %v769 = vunpack.c.l.b16 %v733
      %v770 = vunpack.c.l.b16 %v734
      %v771 = vunpack.c.l.b16 %v735
      %v772 = vunpack.c.l.b16 %v736
      %v773 = vunpack.c.l.b16 %v737
      %v774 = vunpack.c.l.b16 %v738
      %v775 = vunpack.c.l.b16 %v739
      %v776 = vunpack.c.l.b16 %v740
      %v777 = vunpack.c.l.b16 %v741
      %v778 = vunpack.c.l.b16 %v742
      %v779 = vunpack.c.l.b16 %v743
      %v780 = vunpack.c.l.b16 %v744
      %v781 = vunpack.c.l.b16 %v745
      %v782 = vunpack.c.l.b16 %v746
      %v783 = vunpack.c.l.b16 %v747
      %v784 = vpack.c.b16 %v769, %v768
      %v785 = vpack.c.b16 %v771, %v770
      %v786 = vpack.c.b16 %v773, %v772
      %v787 = vpack.c.b16 %v775, %v774
      %v788 = vpack.c.b16 %v777, %v776
      %v789 = vpack.c.b16 %v779, %v778
      %v790 = vpack.c.b16 %v781, %v780
      %v791 = vpack.c.b16 %v783, %v782
      %800 = vmatpush.bf16.msra.mxu0 %v791
      %801 = vmatpush.bf16.msra.mxu0 %v790
      %802 = vmatpush.bf16.msra.mxu0 %v789
      %803 = vmatpush.bf16.msra.mxu0 %v788
      %804 = vmatpush.bf16.msra.mxu0 %v787
      %805 = vmatpush.bf16.msra.mxu0 %v786
      %806 = vmatpush.bf16.msra.mxu0 %v785
      %807 = vmatpush.bf16.msra.mxu0 %v784
      %808 = vmatmul.bf16.gmra.mxu0 %v731
      %v809 = vpop.f32.mrf.mxu0
      %v810 = vadd.f32 %v750, %v809
      %v811 = vpop.f32.mrf.mxu0
      %812 = vdwg.mxu0
      %813 = vst [vmem:[#allocation9] sm:$0x3] %v810
    $region41: #{tpu_custom_call.1} parent=1 // pred_fallthru
      _
    // Predicated region
    $region42: #{tpu_custom_call.1} parent=1 // pred_check
      _
    $region43: #{tpu_custom_call.1} parent=1 // pred_check_branch
      %815 = sbr.rel (0) target = $region45
    $region44: #{tpu_custom_call.1} parent=1 // pred_region
      %817 = vsyncadd [#allocation5], 0
      %s819 = sshll.u32 [#allocation9], 4
      %s820 = int_to_ptr.vmem [resolvable:$true] %s819
      %s821 = sshll.u32 %s5, 4
      %s822 = int_to_ptr.hbm [resolvable:$true] %s821
      %824 = dma.vmem_to_hbm [thread:$0]  %s820, 32, %s822, [#allocation5]
    $region45: #{tpu_custom_call.1} parent=1 // pred_fallthru
      _
    // Predicated region
    $region46: #{tpu_custom_call.1} parent=1 // pred_check
      _
    $region47: #{tpu_custom_call.1} parent=1 // pred_check_branch
      %826 = sbr.rel (0) target = $region49
    $region48: #{tpu_custom_call.1} parent=1 // pred_region
      %828 = dma.done [#allocation5], 32
    $region49: #{tpu_custom_call.1} parent=1 // pred_fallthru
      _
    %829 = vsyncpa [#allocation4], 1
    %830 = vsyncpa [#allocation7], 1
    %831 = vsyncpa [#allocation5], 1

</llo_original>
